<compile_context>
chip_gen: v7x
topology: tpu7x:2x2x1
jax: 0.10.0
libtpu: 0.0.40
codegen_flags: <defaults>
</compile_context>

<pallas_src>
import functools
from typing import Optional, Tuple

import numpy as np

import jax
import jax.numpy as jnp
from jax.experimental import pallas as pl
from jax.experimental.pallas import tpu as pltpu


def _torch_pad_config(in_shape, dimension_sizes) -> Tuple[Tuple[int, int], ...]:
    """Literal re-derivation of torch's build-pairs -> reverse -> F.pad pads."""
    assert len(in_shape) == len(dimension_sizes), (
        "dimension_sizes must have one entry per input dimension")
    flat = []
    for original, padded in zip(in_shape, dimension_sizes):
        if padded is None or original >= padded:
            flat.extend((0, 0))
        else:
            quotient, remainder = divmod(padded - original, 2)
            flat.extend((quotient, quotient + remainder))
    flat = flat[::-1]                                  # torch: padding[::-1]
    ndim = len(in_shape)
    pads = [(0, 0)] * ndim
    for k in range(ndim):                              # F.pad: last dim first
        pads[ndim - 1 - k] = (flat[2 * k], flat[2 * k + 1])
    return tuple(pads)


def _pad_kernel(src_ref, real_ref, x_ref, o_ref, *, h_l, w_l, has_lead_pad,
                has_hw_pad):
    """x_ref: (p_blk, h_in_blk, w_in_blk); o_ref: (p_blk, h_out_blk, w_out_blk)."""
    del src_ref                       # consumed by the input index_map only
    _, h_in_blk, w_in_blk = x_ref.shape

    def write_real():
        if has_hw_pad:
            # Single full-tile zero store + single interior store.
            o_ref[...] = jnp.zeros(o_ref.shape, o_ref.dtype)
            o_ref[:, h_l:h_l + h_in_blk, w_l:w_l + w_in_blk] = x_ref[...]
        else:
            # No trailing-dim padding: pure lane-dense copy, one store.
            o_ref[...] = x_ref[...]

    if not has_lead_pad:
        write_real()
    else:
        is_real = real_ref[pl.program_id(2)] != 0

        @pl.when(is_real)
        def _():
            write_real()

        @pl.when(jnp.logical_not(is_real))
        def _():
            # Pure-pad row: one full-tile zero store; the (repeated) input
            # block index lets the pipeline elide the input re-fetch.
            o_ref[...] = jnp.zeros(o_ref.shape, o_ref.dtype)


class PadDimensionsPallas:
    """Pallas TPU port of zamba's PadDimensions (zero-pad dims to fixed sizes)."""

    _TARGET_BLOCK_BYTES = 1 << 20     # ~1 MiB of output per grid step
    _MAX_BLOCK_BYTES = 6 << 20        # per-block cap (keeps v7x's 64 MiB VMEM safe)
    _MAX_ROW_TABLE = 16384            # SMEM source-row table guard

    def __init__(self, dimension_sizes: Tuple[Optional[int], ...], *,
                 min_pallas_bytes: int = 1 << 20):
        self.dimension_sizes = tuple(dimension_sizes)
        # Outputs smaller than this go to XLA's pad: pallas_call launch plus
        # fixed per-step overhead dominates tiny copies (review item).
        self.min_pallas_bytes = int(min_pallas_bytes)

    # -- semantics ------------------------------------------------------------
    def pad_config(self, in_shape) -> Tuple[Tuple[int, int], ...]:
        return _torch_pad_config(tuple(in_shape), self.dimension_sizes)

    # -- forward --------------------------------------------------------------
    def __call__(self, x: jax.Array) -> jax.Array:
        pads = self.pad_config(x.shape)
        out_shape = tuple(s + l + r for s, (l, r) in zip(x.shape, pads))
        if out_shape == x.shape:
            return x                                    # nothing to pad
        out_nbytes = int(np.prod(out_shape)) * x.dtype.itemsize
        if out_nbytes < self.min_pallas_bytes:
            return jnp.pad(x, pads)                     # overhead-bound: XLA
        return self._pallas_pad(x, pads, out_shape)

    # -- pallas path ----------------------------------------------------------
    def _pallas_pad(self, x, pads, out_shape):
        ndim = x.ndim
        itemsize = x.dtype.itemsize

        # ---- canonical (P, Q, H, W) view ------------------------------------
        padded_dims = [d for d in range(ndim) if pads[d] != (0, 0)]
        lastp = padded_dims[-1]
        if lastp == ndim - 1:
            # Last dim padded: it is W; H is dim -2 (padded or not).
            w_in = x.shape[-1]
            w_l, w_r = pads[-1]
            h_idx = ndim - 2
        else:
            # Trailing unpadded run: keep it merged as a lane-dense W; the
            # last padded dim becomes H.
            w_in = int(np.prod(x.shape[lastp + 1:]))
            w_l, w_r = 0, 0
            h_idx = lastp
        if h_idx >= 0:
            h_in = x.shape[h_idx]
            h_l, h_r = pads[h_idx]
        else:                                           # rank-1 input
            h_in, h_l, h_r = 1, 0, 0
        h_out = h_in + h_l + h_r
        w_out = w_in + w_l + w_r

        r_dims = list(range(max(h_idx, 0)))
        k = 0
        while k < len(r_dims) and pads[r_dims[k]] == (0, 0):
            k += 1
        p_dims, q_dims = r_dims[:k], r_dims[k:]
        P = int(np.prod([x.shape[d] for d in p_dims])) if p_dims else 1
        q_in_sizes = [x.shape[d] for d in q_dims]
        q_out_sizes = [out_shape[d] for d in q_dims]
        q_lefts = [pads[d][0] for d in q_dims]
        Q_in = int(np.prod(q_in_sizes)) if q_dims else 1
        Q_out = int(np.prod(q_out_sizes)) if q_dims else 1
        has_lead_pad = bool(q_dims)

        if Q_out > self._MAX_ROW_TABLE:
            # TODO(synk): huge padded leading extents would need an oversized
            # SMEM row table; defer to XLA's pad.
            return jnp.pad(x, pads)

        # Source-row table (scalar prefetch).  Pad rows repeat a neighbouring
        # real row's input index so consecutive duplicate input block indices
        # let the pipeline elide the (unused) input re-fetch.
        src_fetch = np.zeros((Q_out,), np.int32)
        src_real = np.zeros((Q_out,), np.int32)
        if q_dims:
            last_real = 0
            for flat in range(Q_out):
                out_idx = np.unravel_index(flat, q_out_sizes)
                in_idx = [int(i) - l for i, l in zip(out_idx, q_lefts)]
                if all(0 <= v < s for v, s in zip(in_idx, q_in_sizes)):
                    last_real = int(np.ravel_multi_index(in_idx, q_in_sizes))
                    src_real[flat] = 1
                src_fetch[flat] = last_real
        else:
            src_real[0] = 1

        # ---- block sizing -----------------------------------------------------
        h_mult = max(8, 32 // itemsize)                 # sublane tile incl. packing
        slab_in = h_in * w_in * itemsize
        slab_out = h_out * w_out * itemsize
        block_h = block_w = False
        h_blk_in, h_blk_out = h_in, h_out
        w_blk_in, w_blk_out = w_in, w_out
        grid_s = 1
        if max(slab_in, slab_out) > self._MAX_BLOCK_BYTES:
            if (w_l, w_r) == (0, 0):
                # W unpadded: tile the lane axis in multiples of 128.
                per_col = max(h_in, h_out) * itemsize
                w_blk = (self._TARGET_BLOCK_BYTES // per_col) // 128 * 128
                w_blk = int(min(max(w_blk, 128), w_in))
                if max(h_in, h_out) * w_blk * itemsize > self._MAX_BLOCK_BYTES:
                    # TODO(synk): would need simultaneous H and W tiling.
                    return jnp.pad(x, pads)
                w_blk_in = w_blk_out = w_blk
                grid_s = pl.cdiv(w_in, w_blk)
                block_w = True
            elif (h_l, h_r) == (0, 0):
                # H unpadded: tile the sublane axis.
                per_row = max(w_in, w_out) * itemsize
                h_blk = (self._TARGET_BLOCK_BYTES // per_row) // h_mult * h_mult
                h_blk = int(min(max(h_blk, h_mult), h_in))
                if h_blk * max(w_in, w_out) * itemsize > self._MAX_BLOCK_BYTES:
                    # TODO(synk): would need simultaneous H and W tiling.
                    return jnp.pad(x, pads)
                h_blk_in = h_blk_out = h_blk
                grid_s = pl.cdiv(h_in, h_blk)
                block_h = True
            else:
                # TODO(synk): a slab with BOTH trailing dims padded that does
                # not fit VMEM needs element-offset tiling; defer to XLA.
                return jnp.pad(x, pads)

        out_block_slab = h_blk_out * w_blk_out * itemsize
        p_blk = max(1, min(P, 4096,
                           self._TARGET_BLOCK_BYTES // max(out_block_slab, 1)))
        while P % p_blk:                                # keep P exactly divided
            p_blk -= 1
        grid_p = P // p_blk

        # ---- pallas call ------------------------------------------------------
        x_view = x.reshape(P, Q_in, h_in, w_in)
        out_view_shape = (P, Q_out, h_out, w_out)

        def in_index_map(ip, isp, iq, src_ref, real_ref):
            del real_ref
            return (ip, src_ref[iq], isp if block_h else 0, isp if block_w else 0)

        def out_index_map(ip, isp, iq, src_ref, real_ref):
            del src_ref, real_ref
            return (ip, iq, isp if block_h else 0, isp if block_w else 0)

        in_spec = pl.BlockSpec((p_blk, pl.Squeezed(), h_blk_in, w_blk_in),
                               in_index_map)
        out_spec = pl.BlockSpec((p_blk, pl.Squeezed(), h_blk_out, w_blk_out),
                                out_index_map)

        kernel = functools.partial(
            _pad_kernel,
            h_l=h_l, w_l=w_l,
            has_lead_pad=has_lead_pad,
            has_hw_pad=(h_l + h_r + w_l + w_r) > 0,
        )

        in_block_bytes = p_blk * h_blk_in * w_blk_in * itemsize
        out_block_bytes = p_blk * h_blk_out * w_blk_out * itemsize
        # Double-buffered in + out blocks with headroom, derived from actual
        # block sizes (no hard-coded limit), capped so v7x's 64 MiB VMEM is safe.
        vmem_limit = int(min(max(3 * (in_block_bytes + out_block_bytes) + (2 << 20),
                                 8 << 20), 40 << 20))

        grid = (grid_p, grid_s, Q_out)

        out_view = pl.pallas_call(
            kernel,
            out_shape=jax.ShapeDtypeStruct(out_view_shape, x.dtype),
            grid_spec=pltpu.PrefetchScalarGridSpec(
                num_scalar_prefetch=2,
                grid=grid,
                in_specs=[in_spec],
                out_specs=out_spec,
            ),
            compiler_params=pltpu.CompilerParams(
                # Every grid point owns a distinct output block -> fully
                # parallel; v7x shards the axes across both TensorCores.
                dimension_semantics=("parallel", "parallel", "parallel"),
                vmem_limit_bytes=vmem_limit,
            ),
        )(jnp.asarray(src_fetch), jnp.asarray(src_real), x_view)

        return out_view.reshape(out_shape)


if __name__ == "__main__":
    key = jax.random.PRNGKey(0)
    # Input shaped like a small video clip: (frames, channels, H, W).
    x = jax.random.normal(key, (2, 4, 16, 16), dtype=jnp.float32)

    # min_pallas_bytes=0 so the small test shapes actually exercise the Pallas
    # kernel (the default routes tiny outputs to XLA's pad).
    # Case 1: leading-dim pad (channels 4->8), odd H pad (16->21), W pad (16->20).
    m1 = PadDimensionsPallas((None, 8, 21, 20), min_pallas_bytes=0)
    out1 = jax.block_until_ready(m1(x))
    ref1 = jnp.pad(x, m1.pad_config(x.shape))
    assert out1.shape == ref1.shape == (2, 8, 21, 20), out1.shape
    assert out1.dtype == x.dtype
    assert bool(jnp.array_equal(out1, ref1)), "Pallas pad mismatch (case 1)"

    # Case 2: trailing-dims-only padding (no leading pad, fused P blocks).
    m2 = PadDimensionsPallas((None, None, 20, 24), min_pallas_bytes=0)
    out2 = jax.block_until_ready(m2(x))
    ref2 = jnp.pad(x, m2.pad_config(x.shape))
    assert out2.shape == ref2.shape == (2, 4, 20, 24), out2.shape
    assert bool(jnp.array_equal(out2, ref2)), "Pallas pad mismatch (case 2)"

    # Case 3: pad only the leading frames dim (2->6) -> lane-dense merged W view.
    m3 = PadDimensionsPallas((6, None, None, None), min_pallas_bytes=0)
    out3 = jax.block_until_ready(m3(x))
    ref3 = jnp.pad(x, m3.pad_config(x.shape))
    assert out3.shape == ref3.shape == (6, 4, 16, 16), out3.shape
    assert bool(jnp.array_equal(out3, ref3)), "Pallas pad mismatch (case 3)"

    # Case 4: no padding needed -> the input itself is returned.
    m4 = PadDimensionsPallas((None, 4, 8, 8))
    assert m4(x) is x

    # Case 5: default small-size dispatch (tiny output -> XLA pad path).
    m5 = PadDimensionsPallas((None, 8, 21, 20))
    out5 = jax.block_until_ready(m5(x))
    assert bool(jnp.array_equal(out5, ref1)), "small-size dispatch mismatch"

    # Pad-config sanity: matches torch's build-pairs -> reverse -> F.pad rule
    # (odd pad puts the extra element on the *left* after the reversal).
    assert m1.pad_config(x.shape) == ((0, 0), (2, 2), (3, 2), (2, 2))

    print("KERNEL_OK")
</pallas_src>

<mosaic_0001>
module attributes {stable_mosaic.version = 11 : i64} {
  func.func @_pad_kernel(%arg0: i32, %arg1: i32, %arg2: i32, %arg3: memref<8xi32, #tpu.memory_space<smem>>, %arg4: memref<8xi32, #tpu.memory_space<smem>>, %arg5: memref<2x1x16x16xf32, #tpu.memory_space<vmem>>, %arg6: memref<2x1x21x20xf32, #tpu.memory_space<vmem>>) attributes {dimension_semantics = [#tpu.dimension_semantics<parallel>, #tpu.dimension_semantics<parallel>, #tpu.dimension_semantics<parallel>], iteration_bounds = array<i64: 1, 1, 8>, scalar_prefetch = 2 : i64, scratch_operands = 0 : i64, tpu.core_type = #tpu.core_type<tc>, window_params = [{transform_indices = @transform_0, window_bounds = array<i64: 2, 1, 16, 16>}, {transform_indices = @transform_1, window_bounds = array<i64: 2, 1, 21, 20>}]} {
    %0 = arith.index_cast %arg2 : i32 to index
    %1 = memref.load %arg4[%0] : memref<8xi32, #tpu.memory_space<smem>>
    %c0_i32 = arith.constant 0 : i32
    %2 = arith.cmpi ne, %1, %c0_i32 : i32
    %3 = arith.extui %2 : i1 to i32
    %c0_i32_0 = arith.constant 0 : i32
    %4 = arith.cmpi ne, %3, %c0_i32_0 : i32
    scf.if %4 {
      %cst = arith.constant 0.000000e+00 : f32
      %8 = vector.broadcast %cst : f32 to vector<2x21x20xf32>
      %c0 = arith.constant 0 : index
      %c0_2 = arith.constant 0 : index
      %c0_3 = arith.constant 0 : index
      %c0_4 = arith.constant 0 : index
      %9 = vector.load %arg6[%c0, %c0_2, %c0_3, %c0_4] : memref<2x1x21x20xf32, #tpu.memory_space<vmem>>, vector<2x1x21x20xf32>
      %10 = vector.shape_cast %9 : vector<2x1x21x20xf32> to vector<2x21x20xf32>
      %11 = vector.shape_cast %8 : vector<2x21x20xf32> to vector<2x1x21x20xf32>
      tpu.vector_store %arg6[%c0, %c0_2, %c0_3, %c0_4], %11 {strides = array<i32>} : memref<2x1x21x20xf32, #tpu.memory_space<vmem>>, vector<2x1x21x20xf32>,
      %c0_5 = arith.constant 0 : index
      %c0_6 = arith.constant 0 : index
      %c0_7 = arith.constant 0 : index
      %c0_8 = arith.constant 0 : index
      %12 = vector.load %arg5[%c0_5, %c0_6, %c0_7, %c0_8] : memref<2x1x16x16xf32, #tpu.memory_space<vmem>>, vector<2x1x16x16xf32>
      %13 = vector.shape_cast %12 : vector<2x1x16x16xf32> to vector<2x16x16xf32>
      %c0_9 = arith.constant 0 : index
      %c0_10 = arith.constant 0 : index
      %c3 = arith.constant 3 : index
      %c2 = arith.constant 2 : index
      %14 = vector.load %arg6[%c0_9, %c0_10, %c3, %c2] : memref<2x1x21x20xf32, #tpu.memory_space<vmem>>, vector<2x1x16x16xf32>
      %15 = vector.shape_cast %14 : vector<2x1x16x16xf32> to vector<2x16x16xf32>
      %16 = vector.shape_cast %13 : vector<2x16x16xf32> to vector<2x1x16x16xf32>
      tpu.vector_store %arg6[%c0_9, %c0_10, %c3, %c2], %16 {strides = array<i32>} : memref<2x1x21x20xf32, #tpu.memory_space<vmem>>, vector<2x1x16x16xf32>,
    } else {
    }
    %true = arith.constant true
    %5 = arith.xori %2, %true : i1
    %6 = arith.extui %5 : i1 to i32
    %c0_i32_1 = arith.constant 0 : i32
    %7 = arith.cmpi ne, %6, %c0_i32_1 : i32
    scf.if %7 {
      %cst = arith.constant 0.000000e+00 : f32
      %8 = vector.broadcast %cst : f32 to vector<2x21x20xf32>
      %c0 = arith.constant 0 : index
      %c0_2 = arith.constant 0 : index
      %c0_3 = arith.constant 0 : index
      %c0_4 = arith.constant 0 : index
      %9 = vector.load %arg6[%c0, %c0_2, %c0_3, %c0_4] : memref<2x1x21x20xf32, #tpu.memory_space<vmem>>, vector<2x1x21x20xf32>
      %10 = vector.shape_cast %9 : vector<2x1x21x20xf32> to vector<2x21x20xf32>
      %11 = vector.shape_cast %8 : vector<2x21x20xf32> to vector<2x1x21x20xf32>
      tpu.vector_store %arg6[%c0, %c0_2, %c0_3, %c0_4], %11 {strides = array<i32>} : memref<2x1x21x20xf32, #tpu.memory_space<vmem>>, vector<2x1x21x20xf32>,
    } else {
    }
    return
  }
  func.func @transform_0(%arg0: i32, %arg1: i32, %arg2: i32, %arg3: memref<8xi32, #tpu.memory_space<smem>>, %arg4: memref<8xi32, #tpu.memory_space<smem>>) -> (i32, i32, i32, i32) {
    %0 = arith.index_cast %arg2 : i32 to index
    %1 = memref.load %arg3[%0] : memref<8xi32, #tpu.memory_space<smem>>
    %c0_i32 = arith.constant 0 : i32
    %c0_i32_0 = arith.constant 0 : i32
    %c0_i32_1 = arith.constant 0 : i32
    return %arg0, %1, %c0_i32, %c0_i32_0 : i32, i32, i32, i32
  }
  func.func @transform_1(%arg0: i32, %arg1: i32, %arg2: i32, %arg3: memref<8xi32, #tpu.memory_space<smem>>, %arg4: memref<8xi32, #tpu.memory_space<smem>>) -> (i32, i32, i32, i32) {
    %c0_i32 = arith.constant 0 : i32
    %c0_i32_0 = arith.constant 0 : i32
    %c0_i32_1 = arith.constant 0 : i32
    return %arg0, %arg2, %c0_i32, %c0_i32_0 : i32, i32, i32, i32
  }
}

</mosaic_0001>

<llo_original>
// kernel: tpu_custom_call.1
$region0: #{tpu_custom_call.1}
  #allocation0 [shape = 'u32[]', space=smem, size = 0x4, offset = 0x4, fixed_abs, tag = 'smem constant byte address 0x4 - core index']
  #allocation1 [shape = 'u32[144,128]{1,0:T(1,128)}', space=vmem, size = 0x12000, scoped, tag = 'internal scratch']
  #allocation2 [shape = 's32[1]{0}', space=sflag, size = 0x4, scoped, tag = 'scoped memory for tpu_custom_call.1']
  #allocation3 [shape = 'u8[512]{0}', space=smem, size = 0x200, scoped, tag = 'prefetched SMEM operand 0']
  #allocation4 [shape = 'u8[512]{0}', space=smem, size = 0x200, scoped, tag = 'prefetched SMEM operand 1']
  #allocation8 [shape = 's32[]', space=sflag, size = 0x4, offset = 0, fixed_abs, tag = 'sflag constant byte address 0x0 - dummy sync flag']
  %s0 = inlined_call_operand.hbm [shape: s32[8], index: 0, kind: input, shape index: {}]
  %s1 = inlined_call_operand.vmem [shape: s32[8], index: 1, kind: input, shape index: {}]
  %s2 = inlined_call_operand.hbm [shape: f32[2,4,16,16], index: 2, kind: input, shape index: {}]
  %s3 = inlined_call_operand.vmem [shape: f32[2,8,21,20], index: 3, kind: output, shape index: {}]
  %s4 = sld [smem:[#allocation0]]
  $region83: #{tpu_custom_call.1} parent=0
    _
  %s6 = ssub.s32 1, %s4
  %s7 = scalar_select 0, %s6, %s4
  %9 = dma.hbm_to_smem %s0, 16, [#allocation3], [#allocation2]
  %s10 = sshll.u32 %s1, 4
  %s11 = int_to_ptr.vmem [resolvable:$true] %s10
  %13 = dma.vmem_to_smem %s11, 16, [#allocation4], [#allocation2]
  %14 = dma.done [#allocation2], 32
  %15 = sfence
  $region1: #{tpu_custom_call.1} parent=0
    #allocation5 [shape = 'u8[32768]{0}', space=vmem, size = 0x8000, scoped, tag = 'input window, operand 2']
    #allocation6 [shape = 's32[2]{0}', space=sflag, size = 0x8, scoped, tag = 'scoped memory for tpu_custom_call.1']
    #allocation7 [shape = 'u8[49152]{0}', space=vmem, size = 0xc000, scoped, tag = 'output window, operand 0']
    %16 = vsyncpa [#allocation6], 0
    %s17 = scalar_lea.sflag [#allocation6], 1
    %18 = vsyncpa %s17, 0
    loop: start=0, step=1, limit=10
    $region2: #{tpu_custom_call.1} parent=1 // loop_pre_header
      _
    $region3: #{tpu_custom_call.1} parent=1 // loop_header
      %s20 = sphi 0, %s24
      %p21 = scmp.ge.s32.totalorder %s20, 10
      %s27 = sphi 0, %s46
      %s28 = sphi 0, %s42
      %s29 = sphi 0, %s38
      %s30 = sphi 0, %s27
      %s31 = sphi 0, %s28
      %s32 = sphi 0, %s29
      %s33 = sphi 0, %s30
      %s34 = sphi 0, %s31
      %s35 = sphi 0, %s32
      %s53 = sphi 0, %s55
      %s56 = sphi 0, %s53
      %s57 = sphi 0, %s56
      %s73 = sphi 0, %s57
      %s81 = sphi 0, %s83
      %s84 = sphi 0, %s81
      %s85 = sphi 0, %s84
      %s101 = sphi 0, %s85
    $region4: #{tpu_custom_call.1} parent=1 // loop_header_branch
      %23 = sbr.rel (%p21) target = $region8
    $region5: #{tpu_custom_call.1} parent=1 // loop_body
      %s25 = ssub.s32 %s20, 1
      %s26 = ssub.s32 %s20, 2
      %s36 = sadd.s32 1, %s29
      %p37 = scmp.ge.s32.totalorder %s36, 8
      %s38 = scalar_select %p37, 0, %s36
      %s39 = sadd.s32 1, %s28
      %s40 = scalar_select %p37, %s39, %s28
      %p41 = scmp.ge.s32.totalorder %s40, 1
      %s42 = scalar_select %p41, 0, %s40
      %s43 = sadd.s32 1, %s27
      %s44 = scalar_select %p41, %s43, %s27
      %p45 = scmp.ge.s32.totalorder %s44, 1
      %s46 = scalar_select %p45, 0, %s44
      %s47 = sld [smem:[#allocation3 + %s29]]
      %s48 = sld [smem:[#allocation3 + %s38]]
      %s49 = ssub.s32 %s27, %s46
      %s50 = ssub.s32 %s47, %s48
      %s51 = sor.u32 %s49, %s50
      %p52 = scmp.eq.s32.totalorder %s51, 0
      %s54 = sadd.s32 %s53, 1
      %s55 = scalar_select %p52, %s53, %s54
      %p58 = pneg %p52
      %p59 = scmp.eq.s32.totalorder %s20, 7
      %p60 = por %p58, %p59
      %p61 = scmp.ne.s32.totalorder %s53, %s56
      %p62 = scmp.eq.s32.totalorder %s20, 0
      %p63 = por %p61, %p62
      %p64 = scmp.ne.s32.totalorder %s53, %s56
      %p65 = scmp.eq.s32.totalorder %s25, 7
      %p66 = por %p64, %p65
      %p67 = scmp.ne.s32.totalorder %s56, %s57
      %p68 = scmp.eq.s32.totalorder %s25, 0
      %p69 = por %p67, %p68
      %p70 = scmp.ne.s32.totalorder %s56, %s57
      %p71 = scmp.eq.s32.totalorder %s26, 7
      %p72 = por %p70, %p71
      %p74 = scmp.ne.s32.totalorder %s57, %s73
      %p75 = scmp.eq.s32.totalorder %s26, 0
      %p76 = por %p74, %p75
      %s77 = ssub.s32 %s27, %s46
      %s78 = ssub.s32 %s29, %s38
      %s79 = sor.u32 %s77, %s78
      %p80 = scmp.eq.s32.totalorder %s79, 0
      %s82 = sadd.s32 %s81, 1
      %s83 = scalar_select %p80, %s81, %s82
      %p86 = pneg %p80
      %p87 = scmp.eq.s32.totalorder %s20, 7
      %p88 = por %p86, %p87
      %p89 = scmp.ne.s32.totalorder %s81, %s84
      %p90 = scmp.eq.s32.totalorder %s20, 0
      %p91 = por %p89, %p90
      %p92 = scmp.ne.s32.totalorder %s81, %s84
      %p93 = scmp.eq.s32.totalorder %s25, 7
      %p94 = por %p92, %p93
      %p95 = scmp.ne.s32.totalorder %s84, %s85
      %p96 = scmp.eq.s32.totalorder %s25, 0
      %p97 = por %p95, %p96
      %p98 = scmp.ne.s32.totalorder %s84, %s85
      %p99 = scmp.eq.s32.totalorder %s26, 7
      %p100 = por %p98, %p99
      %p102 = scmp.ne.s32.totalorder %s85, %s101
      %p103 = scmp.eq.s32.totalorder %s26, 0
      %p104 = por %p102, %p103
      %p105 = scmp.le.s32.totalorder 1, %s20
      %p106 = scmp.lt.s32.totalorder %s20, 9
      %p107 = pnand %p105, %p106
      %p108 = pneg %p107
      // Predicated region
      $region9: #{tpu_custom_call.1} parent=5 // pred_check
        _
      $region10: #{tpu_custom_call.1} parent=5 // pred_check_branch
        %110 = sbr.rel (%p107) target = $region12
      $region11: #{tpu_custom_call.1} parent=5 // pred_region
        %s111 = ssub.s32 %s20, 1
      $region12: #{tpu_custom_call.1} parent=5 // pred_fallthru
        _
      %p112 = scmp.lt.s32.totalorder %s20, 8
      // Predicated region
      $region13: #{tpu_custom_call.1} parent=5 // pred_check
        %p113 = pneg %p112
      $region14: #{tpu_custom_call.1} parent=5 // pred_check_branch
        %115 = sbr.rel (%p113) target = $region16
      $region15: #{tpu_custom_call.1} parent=5 // pred_region
        // Predicated region
        $region17: #{tpu_custom_call.1} parent=15 // pred_check
          %p116 = pneg %p63
        $region18: #{tpu_custom_call.1} parent=15 // pred_check_branch
          %118 = sbr.rel (%p116) target = $region20
        $region19: #{tpu_custom_call.1} parent=15 // pred_region
          #allocation9 [shape = 'u32[6]{0}', space=smem, size = 0x18, scoped, tag = 'DMA stride descriptor']
          %s119 = sand.u32 %s53, 1
          %s120 = scalar_lea.sflag [#allocation6], %s119
          %s121 = sand.u32 %s53, 1
          %s122 = smul.addr %s121, 32
          %s123 = scalar_lea.vmem [#allocation5], %s122
          %s124 = sld [smem:[#allocation3 + %s29]]
          %s125 = smul.u32 2, %s27
          %s127 = ssub.s32 512, 512
          %128 = vsyncadd %s120, %s127
          %s129 = smul.addr %s124, 2
          %s130 = smul.addr %s125, 8
          %s131 = sadd.s32 %s129, %s130
          %s132 = smul.addr %s131, 128
          %s133 = scalar_lea.hbm %s2, %s132
          %s135 = sshll.u32 1, 14
          %s136 = sxor.u32 4294967295, %s135
          %s138 = sld [smem:[#allocation0]]
          %s139 = sadd.s32 2, %s138
          %s141 = sshll.u32 7, 26
          %s142 = sxor.u32 4294967295, %s141
          %s143 = sand.u32 0, %s142
          %s144 = sshll.u32 %s139, 26
          %s145 = sor.u32 %s143, %s144
          %s146 = sshll.u32 %s123, 4
          %s147 = int_to_ptr.vmem [resolvable:$true] %s146
          %153 = sst [smem:[#allocation9]] 1024
          %s154 = scalar_lea.smem [#allocation9], 1
          %155 = sst [smem:[%s154]] 256
          %s156 = scalar_lea.smem [#allocation9], 2
          %157 = sst [smem:[%s156]] 2
          %s158 = scalar_lea.smem [#allocation9], 3
          %159 = sst [smem:[%s158]] 128
          %s160 = scalar_lea.smem [#allocation9], 4
          %161 = sst [smem:[%s160]] 128
          %s162 = scalar_lea.smem [#allocation9], 5
          %163 = sst [smem:[%s162]] 8
          %165 = dma.general %s133, 512, %s147, %s120, [#allocation8], [#allocation9], %s145, 0
        $region20: #{tpu_custom_call.1} parent=15 // pred_fallthru
          _
      $region16: #{tpu_custom_call.1} parent=5 // pred_fallthru
        _
      %p166 = scmp.le.s32.totalorder 1, %s20
      %p167 = scmp.lt.s32.totalorder %s20, 9
      %p168 = pnand %p166, %p167
      %p169 = pneg %p168
      // Predicated region
      $region21: #{tpu_custom_call.1} parent=5 // pred_check
        _
      $region22: #{tpu_custom_call.1} parent=5 // pred_check_branch
        %171 = sbr.rel (%p168) target = $region24
      $region23: #{tpu_custom_call.1} parent=5 // pred_region
        %s172 = ssub.s32 %s20, 1
        %s173 = sand.u32 %s56, 1
        %s174 = scalar_lea.sflag [#allocation6], %s173
        %s175 = sand.u32 %s56, 1
        %s176 = smul.addr %s175, 32
        %s177 = scalar_lea.vmem [#allocation5], %s176
        // Predicated region
        $region25: #{tpu_custom_call.1} parent=23 // pred_check
          %p178 = pneg %p69
        $region26: #{tpu_custom_call.1} parent=23 // pred_check_branch
          %180 = sbr.rel (%p178) target = $region28
        $region27: #{tpu_custom_call.1} parent=23 // pred_region
          %181 = dma.done %s174, 512
        $region28: #{tpu_custom_call.1} parent=23 // pred_fallthru
          _
        %s182 = sand.u32 %s56, 1
        %s183 = scalar_lea.sflag [#allocation6], %s182
        %s184 = sand.u32 %s56, 1
        %s185 = smul.addr %s184, 32
        %s186 = scalar_lea.vmem [#allocation5], %s185
        %p187 = pneg %p69
        %p188 = pneg %p66
        %p189 = pneg %p97
        %p190 = pneg %p94
        %s191 = sand.u32 %s84, 1
        %s192 = sand.u32 %s84, 1
        %s193 = smul.addr %s192, 48
        %s194 = scalar_lea.vmem [#allocation7], %s193
        %s195 = sld [smem:[#allocation3 + %s32]]
        %s196 = smul.u32 2, %s30
        %s197 = smul.u32 2, %s30
        %s198 = sld [smem:[#allocation4 + %s32]]
        %p199 = scmp.ne.s32.totalorder %s198, 0
        // Predicated region
        $region29: #{tpu_custom_call.1} parent=23 // pred_check
          %p200 = pneg %p199
        $region30: #{tpu_custom_call.1} parent=23 // pred_check_branch
          %202 = sbr.rel (%p200) target = $region32
        $region31: #{tpu_custom_call.1} parent=23 // pred_region
          %vm203 = vcmask 162816
          %204 = vst.msk [vmem:[%s194] sm:$0xff] %vm203, 0.0
          %205 = vst.msk [vmem:[%s194 + $0x8] sm:$0xff] %vm203, 0.0
          %vm206 = vcmask 159744
          %207 = vst.msk [vmem:[%s194 + $0x10] sm:$0x1f] %vm206, 0.0
          %208 = vst.msk [vmem:[%s194 + $0x18] sm:$0xff] %vm203, 0.0
          %209 = vst.msk [vmem:[%s194 + $0x20] sm:$0xff] %vm203, 0.0
          %210 = vst.msk [vmem:[%s194 + $0x28] sm:$0x1f] %vm206, 0.0
          %v211 = vld [vmem:[%s177] sm:$0xff]
          %v212 = vld [vmem:[%s177 + $0x8] sm:$0xff]
          %v213 = vld [vmem:[%s177 + $0x10] sm:$0xff]
          %v214 = vld [vmem:[%s177 + $0x18] sm:$0xff]
          %219 = vrot.lane.b32.xlu0 %v211, 2
          %v220 = vpop.permute.xlu0 %219
          %221 = vrot.lane.b32.xlu0 %v212, 2
          %v222 = vpop.permute.xlu0 %221
          %223 = vrot.lane.b32.xlu0 %v213, 2
          %v224 = vpop.permute.xlu0 %223
          %225 = vrot.lane.b32.xlu0 %v214, 2
          %v226 = vpop.permute.xlu0 %225
          %vm231 = vcmask 146448
          %232 = vst.msk [vmem:[%s194 + $0x3] sm:$0xff] %vm231, %v220
          %233 = vst.msk [vmem:[%s194 + $0xb] sm:$0xff] %vm231, %v222
          %234 = vst.msk [vmem:[%s194 + $0x1b] sm:$0xff] %vm231, %v224
          %235 = vst.msk [vmem:[%s194 + $0x23] sm:$0xff] %vm231, %v226
        $region32: #{tpu_custom_call.1} parent=23 // pred_fallthru
          _
        %p236 = scmp.eq.s32.totalorder %s198, 0
        // Predicated region
        $region33: #{tpu_custom_call.1} parent=23 // pred_check
          %p237 = pneg %p236
        $region34: #{tpu_custom_call.1} parent=23 // pred_check_branch
          %239 = sbr.rel (%p237) target = $region36
        $region35: #{tpu_custom_call.1} parent=23 // pred_region
          %vm240 = vcmask 162816
          %241 = vst.msk [vmem:[%s194] sm:$0xff] %vm240, 0.0
          %242 = vst.msk [vmem:[%s194 + $0x8] sm:$0xff] %vm240, 0.0
          %vm243 = vcmask 159744
          %244 = vst.msk [vmem:[%s194 + $0x10] sm:$0x1f] %vm243, 0.0
          %245 = vst.msk [vmem:[%s194 + $0x18] sm:$0xff] %vm240, 0.0
          %246 = vst.msk [vmem:[%s194 + $0x20] sm:$0xff] %vm240, 0.0
          %247 = vst.msk [vmem:[%s194 + $0x28] sm:$0x1f] %vm243, 0.0
        $region36: #{tpu_custom_call.1} parent=23 // pred_fallthru
          _
        %s248 = sand.u32 %s84, 1
        %s249 = sand.u32 %s84, 1
        %s250 = smul.addr %s249, 48
        %s251 = scalar_lea.vmem [#allocation7], %s250
        // Predicated region
        $region37: #{tpu_custom_call.1} parent=23 // pred_check
          %p252 = pneg %p94
        $region38: #{tpu_custom_call.1} parent=23 // pred_check_branch
          %254 = sbr.rel (%p252) target = $region40
        $region39: #{tpu_custom_call.1} parent=23 // pred_region
          %s255 = smul.u32 2, %s30
          %s256 = smul.addr %s32, 3
          %s257 = smul.addr %s255, 24
          %s258 = sadd.s32 %s256, %s257
          %s259 = smul.addr %s258, 8
          %s260 = scalar_lea.vmem %s3, %s259
          // Predicated region
          $region41: #{tpu_custom_call.1} parent=39 // pred_check
            _
          $region42: #{tpu_custom_call.1} parent=39 // pred_check_branch
            %262 = sbr.rel (0) target = $region44
          $region43: #{tpu_custom_call.1} parent=39 // pred_region
            // Predicated region
            $region45: #{tpu_custom_call.1} parent=43 // pred_check
              _
            $region46: #{tpu_custom_call.1} parent=43 // pred_check_branch
              %264 = sbr.rel (0) target = $region48
            $region47: #{tpu_custom_call.1} parent=43 // pred_region
              // Predicated region
              $region60: #{tpu_custom_call.1} parent=47 // pred_check
                _
              $region61: #{tpu_custom_call.1} parent=47 // pred_check_branch
                %289 = sbr.rel (0) target = $region63
              $region62: #{tpu_custom_call.1} parent=47 // pred_region
                loop: start=0, step=1, limit=1
                $region64: #{tpu_custom_call.1} parent=62 // loop_pre_header
                  _
                $region65: #{tpu_custom_call.1} parent=62 // loop_header
                  %s291 = sphi 0, %s295
                  %p292 = scmp.ge.s32.totalorder %s291, 1
                  %s296 = sphi %s251, %s251
                  %s297 = sphi %s260, %s260
                $region66: #{tpu_custom_call.1} parent=62 // loop_header_branch
                  %294 = sbr.rel (%p292) target = $region70
                $region67: #{tpu_custom_call.1} parent=62 // loop_body
                  %v298 = vld [vmem:[%s296] sm:$0xff]
                  %299 = vst [vmem:[%s297] sm:$0xff] %v298
                  %v300 = vld [vmem:[%s296 + $0x8] sm:$0xff]
                  %301 = vst [vmem:[%s297 + $0x8] sm:$0xff] %v300
                  %v302 = vld [vmem:[%s296 + $0x10] sm:$0xff]
                  %303 = vst [vmem:[%s297 + $0x10] sm:$0xff] %v302
                  %v304 = vld [vmem:[%s296 + $0x18] sm:$0xff]
                  %305 = vst [vmem:[%s297 + $0xc0] sm:$0xff] %v304
                  %v306 = vld [vmem:[%s296 + $0x20] sm:$0xff]
                  %307 = vst [vmem:[%s297 + $0xc8] sm:$0xff] %v306
                  %v308 = vld [vmem:[%s296 + $0x28] sm:$0xff]
                  %309 = vst [vmem:[%s297 + $0xd0] sm:$0xff] %v308
                $region68: #{tpu_custom_call.1} parent=62 // loop_footer
                  %s295 = sadd.s32 1, %s291
                $region69: #{tpu_custom_call.1} parent=62 // loop_footer_branch
                  %290 = sbr.rel target = $region65
                $region70: #{tpu_custom_call.1} parent=62 // loop_exit
                  _
              $region63: #{tpu_custom_call.1} parent=47 // pred_fallthru
                _
              // Predicated region
              $region71: #{tpu_custom_call.1} parent=47 // pred_check
                _
              $region72: #{tpu_custom_call.1} parent=47 // pred_check_branch
                %311 = sbr.rel target = $region74
              $region73: #{tpu_custom_call.1} parent=47 // pred_region
                _
              $region74: #{tpu_custom_call.1} parent=47 // pred_fallthru
                _
            $region48: #{tpu_custom_call.1} parent=43 // pred_fallthru
              _
            // Predicated region
            $region49: #{tpu_custom_call.1} parent=43 // pred_check
              _
            $region50: #{tpu_custom_call.1} parent=43 // pred_check_branch
              %266 = sbr.rel target = $region52
            $region51: #{tpu_custom_call.1} parent=43 // pred_region
              loop: start=0, step=1, limit=1
              $region53: #{tpu_custom_call.1} parent=51 // loop_pre_header
                _
              $region54: #{tpu_custom_call.1} parent=51 // loop_header
                %s269 = sphi 0, %s273
                %p270 = scmp.ge.s32.totalorder %s269, 1
                %s274 = sphi %s251, %s251
                %s275 = sphi %s260, %s260
              $region55: #{tpu_custom_call.1} parent=51 // loop_header_branch
                %272 = sbr.rel (%p270) target = $region59
              $region56: #{tpu_custom_call.1} parent=51 // loop_body
                %v276 = vld [vmem:[%s274] sm:$0xff]
                %277 = vst [vmem:[%s275] sm:$0xff] %v276
                %v278 = vld [vmem:[%s274 + $0x8] sm:$0xff]
                %279 = vst [vmem:[%s275 + $0x8] sm:$0xff] %v278
                %v280 = vld [vmem:[%s274 + $0x10] sm:$0xff]
                %281 = vst [vmem:[%s275 + $0x10] sm:$0xff] %v280
                %v282 = vld [vmem:[%s274 + $0x18] sm:$0xff]
                %283 = vst [vmem:[%s275 + $0xc0] sm:$0xff] %v282
                %v284 = vld [vmem:[%s274 + $0x20] sm:$0xff]
                %285 = vst [vmem:[%s275 + $0xc8] sm:$0xff] %v284
                %v286 = vld [vmem:[%s274 + $0x28] sm:$0xff]
                %287 = vst [vmem:[%s275 + $0xd0] sm:$0xff] %v286
              $region57: #{tpu_custom_call.1} parent=51 // loop_footer
                %s273 = sadd.s32 1, %s269
              $region58: #{tpu_custom_call.1} parent=51 // loop_footer_branch
                %268 = sbr.rel target = $region54
              $region59: #{tpu_custom_call.1} parent=51 // loop_exit
                _
            $region52: #{tpu_custom_call.1} parent=43 // pred_fallthru
              _
          $region44: #{tpu_custom_call.1} parent=39 // pred_fallthru
            _
          %312 = vnop
        $region40: #{tpu_custom_call.1} parent=23 // pred_fallthru
          _
      $region24: #{tpu_custom_call.1} parent=5 // pred_fallthru
        _
      %p313 = scmp.le.s32.totalorder 2, %s20
      // Predicated region
      $region75: #{tpu_custom_call.1} parent=5 // pred_check
        %p314 = pneg %p313
      $region76: #{tpu_custom_call.1} parent=5 // pred_check_branch
        %316 = sbr.rel (%p314) target = $region78
      $region77: #{tpu_custom_call.1} parent=5 // pred_region
        %s317 = ssub.s32 %s20, 2
        // Predicated region
        $region79: #{tpu_custom_call.1} parent=77 // pred_check
          %p318 = pneg %p100
        $region80: #{tpu_custom_call.1} parent=77 // pred_check_branch
          %320 = sbr.rel (%p318) target = $region82
        $region81: #{tpu_custom_call.1} parent=77 // pred_region
          %s321 = sand.u32 %s85, 1
          %s322 = sand.u32 %s85, 1
          %s323 = smul.addr %s322, 48
          %s324 = scalar_lea.vmem [#allocation7], %s323
        $region82: #{tpu_custom_call.1} parent=77 // pred_fallthru
          _
      $region78: #{tpu_custom_call.1} parent=5 // pred_fallthru
        _
    $region6: #{tpu_custom_call.1} parent=1 // loop_footer
      %s24 = sadd.s32 1, %s20
    $region7: #{tpu_custom_call.1} parent=1 // loop_footer_branch
      %19 = sbr.rel target = $region3
    $region8: #{tpu_custom_call.1} parent=1 // loop_exit
      _
    %325 = vsyncpa [#allocation6], 1
    %s326 = scalar_lea.sflag [#allocation6], 1
    %327 = vsyncpa %s326, 1

</llo_original>
